<compile_context>
chip_gen: v7x
topology: tpu7x:2x2x1
jax: 0.10.0
libtpu: 0.0.40
codegen_flags: <defaults>
</compile_context>

<pallas_src>
import math

import jax
import jax.numpy as jnp
from jax.experimental import pallas as pl
from jax.experimental.pallas import tpu as pltpu


def _round_up(x: int, m: int) -> int:
    return ((x + m - 1) // m) * m


def _round_down(x: int, m: int) -> int:
    return (x // m) * m


# ----------------------------------------------------------------------------
# Kernel: elementwise max over K same-shaped VMEM tiles (fused stack + max).
# dtype promotion happens in-kernel (free VPU work; the vld slot / HBM BW saturates first).
# ----------------------------------------------------------------------------
def _max_kernel(*refs):
    in_refs, out_ref = refs[:-1], refs[-1]
    acc = in_refs[0][...].astype(out_ref.dtype)
    for r in in_refs[1:]:
        acc = jnp.maximum(acc, r[...].astype(out_ref.dtype))
    out_ref[...] = acc


# ----------------------------------------------------------------------------
# Wrapper
# ----------------------------------------------------------------------------
_SMALL_FALLBACK_ELEMS = 16384          # below this, XLA's fused stack+max wins
_LANE_WIDTH_CANDIDATES = (512, 256, 128)
_MAX_BLOCK_COLS = 512


def _vmem_capacity_bytes() -> int:
    """Per-TensorCore VMEM capacity; conservative (v7x-like) default if unavailable."""
    try:
        return int(pltpu.get_tpu_info().vmem_capacity_bytes)
    except Exception:
        return 64 * 1024 * 1024


def max_hierarchical_forward(inputs, *, block_rows: int = 512, use_pallas=None):
    """Forward pass of MaxHierarchicalLayer for a Mapping[str, Array] of same-shaped arrays."""
    vals = list(inputs.values())
    if not vals:
        raise ValueError("MaxHierarchicalLayer needs at least one input tensor")
    orig_shape = tuple(vals[0].shape)
    for v in vals:
        if tuple(v.shape) != orig_shape:
            raise ValueError("all inputs must share the same shape")

    # NOTE: jnp.result_type may differ from torch promotion for exotic mixes (int + f16).
    out_dtype = jnp.result_type(*[v.dtype for v in vals])
    n_in = len(vals)
    N = math.prod(orig_shape) if orig_shape else 1

    if n_in == 1:
        return vals[0].astype(out_dtype)

    # Small-input fallback: launch overhead + reshapes would dominate a tiny streaming max.
    if use_pallas is None:
        use_pallas = N >= _SMALL_FALLBACK_ELEMS
    if not use_pallas:
        return jnp.max(jnp.stack(vals, axis=0), axis=0).astype(out_dtype)

    # ---- layout: free (copy-less) 2-D reshape, no padding ------------------------------
    if N % 128 == 0:
        # Fully flatten and re-fold into a lane-dense slab; padding waste = 0.
        cols = next(c for c in _LANE_WIDTH_CANDIDATES if N % c == 0)
        rows = N // cols
    else:
        # Keep the natural last dim as the lane axis; ragged blocks are masked by Pallas.
        cols = orig_shape[-1] if orig_shape else 1
        cols = max(cols, 1)
        rows = max(N // cols, 1)
    arrs2d = [v.reshape(rows, cols) for v in vals]

    # ---- tile sizing --------------------------------------------------------------------
    in_itemsizes = [jnp.dtype(v.dtype).itemsize for v in vals]
    out_itemsize = jnp.dtype(out_dtype).itemsize
    min_itemsize = min(in_itemsizes + [out_itemsize])
    subl = max(8, 32 // min_itemsize)          # packed sublane multiple: f32 8, bf16 16, i8 32

    if cols % 128 == 0:
        tc = min(cols, _MAX_BLOCK_COLS)
    elif cols <= _MAX_BLOCK_COLS:
        tc = cols                              # full (unaligned) lane extent — allowed
    else:
        tc = _MAX_BLOCK_COLS                   # 128-aligned tile, masked ragged tail block

    # Per-generation VMEM working-set budget: (K inputs + 1 output), double-buffered.
    vmem_cap = _vmem_capacity_bytes()
    if vmem_cap >= 128 * 1024 * 1024:          # v5e / v6e
        ws_budget = 40 * 1024 * 1024
        vmem_limit = 64 * 1024 * 1024
    else:                                      # v7x (64 MiB per TC) or unknown
        ws_budget = 20 * 1024 * 1024
        vmem_limit = 44 * 1024 * 1024

    bytes_per_row_of_blocks = 2 * tc * (sum(in_itemsizes) + out_itemsize)
    tb_cap = max(subl, _round_down(ws_budget // bytes_per_row_of_blocks, subl))
    tb = min(_round_up(block_rows, subl), _round_up(rows, subl), tb_cap)

    # Make sure there are >= 2 blocks so v7x's two TensorCores both get work.
    if pl.cdiv(rows, tb) * pl.cdiv(cols, tc) < 2 and rows >= 2 * subl:
        tb = _round_up(pl.cdiv(rows, 2), subl)

    grid = (pl.cdiv(rows, tb), pl.cdiv(cols, tc))
    spec = pl.BlockSpec((tb, tc), lambda i, j: (i, j))

    cost = pl.CostEstimate(
        flops=(n_in - 1) * N,
        transcendentals=0,
        bytes_accessed=N * (sum(in_itemsizes) + out_itemsize),
    )

    out2d = pl.pallas_call(
        _max_kernel,
        out_shape=jax.ShapeDtypeStruct((rows, cols), out_dtype),
        grid=grid,
        in_specs=[spec] * n_in,
        out_specs=spec,
        compiler_params=pltpu.CompilerParams(
            dimension_semantics=("parallel", "parallel"),
            vmem_limit_bytes=vmem_limit,
        ),
        cost_estimate=cost,
    )(*arrs2d)

    return out2d.reshape(orig_shape)


# ----------------------------------------------------------------------------
# Pure-JAX reference (matches torch.stack(...) followed by max over dim 0)
# ----------------------------------------------------------------------------
def reference_forward(inputs):
    return jnp.max(jnp.stack(list(inputs.values()), axis=0), axis=0)


# ----------------------------------------------------------------------------
if __name__ == "__main__":
    key = jax.random.PRNGKey(0)

    def make_levels(key, shape, n_levels, dtype=jnp.float32):
        out = {}
        for lvl in range(n_levels):
            key, k = jax.random.split(key)
            out[f"level_{lvl}"] = jax.random.uniform(k, shape, dtype=jnp.float32).astype(dtype)
        return key, out

    # 1) Pallas path, lane-dense flatten (64*384 elements, 512-aligned -> (48, 512) slab).
    key, inputs_a = make_levels(key, (64, 384), 3)
    out_a = jax.block_until_ready(max_hierarchical_forward(inputs_a))
    ref_a = reference_forward(inputs_a)
    assert out_a.shape == (64, 384), f"bad shape {out_a.shape}"
    assert out_a.dtype == ref_a.dtype
    assert jnp.allclose(out_a, ref_a), "mismatch vs JAX reference (lane-dense case)"

    # 2) Pallas path, unaligned shape -> ragged (masked) edge blocks, no padding copies.
    key, inputs_b = make_levels(key, (37, 133), 3)
    out_b = jax.block_until_ready(max_hierarchical_forward(inputs_b, use_pallas=True))
    ref_b = reference_forward(inputs_b)
    assert out_b.shape == (37, 133)
    assert jnp.allclose(out_b, ref_b), "mismatch vs JAX reference (ragged case)"

    # 3) Pallas path, mixed dtypes (bf16 + f32): promotion happens in-kernel.
    key, k1 = jax.random.split(key)
    key, k2 = jax.random.split(key)
    inputs_c = {
        "coarse": jax.random.uniform(k1, (48, 256), dtype=jnp.float32).astype(jnp.bfloat16),
        "fine": jax.random.uniform(k2, (48, 256), dtype=jnp.float32),
    }
    out_c = jax.block_until_ready(max_hierarchical_forward(inputs_c, use_pallas=True))
    ref_c = reference_forward(inputs_c)
    assert out_c.dtype == ref_c.dtype
    assert jnp.allclose(out_c, ref_c), "mismatch vs JAX reference (mixed-dtype case)"

    # 4) Tiny input like the module's typical (batch, num_classes): fused-XLA fallback path.
    key, inputs_d = make_levels(key, (8, 16), 3)
    out_d = jax.block_until_ready(max_hierarchical_forward(inputs_d))
    ref_d = reference_forward(inputs_d)
    assert out_d.shape == (8, 16)
    assert jnp.allclose(out_d, ref_d), "mismatch vs JAX reference (small fallback)"

    print("KERNEL_OK")
</pallas_src>

<mosaic_0001>
module attributes {stable_mosaic.version = 11 : i64} {
  func.func @_max_kernel(%arg0: i32, %arg1: i32, %arg2: memref<24x512xf32, #tpu.memory_space<vmem>>, %arg3: memref<24x512xf32, #tpu.memory_space<vmem>>, %arg4: memref<24x512xf32, #tpu.memory_space<vmem>>, %arg5: memref<24x512xf32, #tpu.memory_space<vmem>>) attributes {dimension_semantics = [#tpu.dimension_semantics<parallel>, #tpu.dimension_semantics<parallel>], iteration_bounds = array<i64: 2, 1>, scalar_prefetch = 0 : i64, scratch_operands = 0 : i64, tpu.core_type = #tpu.core_type<tc>, window_params = [{transform_indices = @transform_0, window_bounds = array<i64: 24, 512>}, {transform_indices = @transform_1, window_bounds = array<i64: 24, 512>}, {transform_indices = @transform_2, window_bounds = array<i64: 24, 512>}, {transform_indices = @transform_3, window_bounds = array<i64: 24, 512>}]} {
    %c0 = arith.constant 0 : index
    %c0_0 = arith.constant 0 : index
    %0 = vector.load %arg2[%c0, %c0_0] : memref<24x512xf32, #tpu.memory_space<vmem>>, vector<24x512xf32>
    %c0_1 = arith.constant 0 : index
    %c0_2 = arith.constant 0 : index
    %1 = vector.load %arg3[%c0_1, %c0_2] : memref<24x512xf32, #tpu.memory_space<vmem>>, vector<24x512xf32>
    %2 = arith.maximumf %0, %1 : vector<24x512xf32>
    %c0_3 = arith.constant 0 : index
    %c0_4 = arith.constant 0 : index
    %3 = vector.load %arg4[%c0_3, %c0_4] : memref<24x512xf32, #tpu.memory_space<vmem>>, vector<24x512xf32>
    %4 = arith.maximumf %2, %3 : vector<24x512xf32>
    %c0_5 = arith.constant 0 : index
    %c0_6 = arith.constant 0 : index
    %5 = vector.load %arg5[%c0_5, %c0_6] : memref<24x512xf32, #tpu.memory_space<vmem>>, vector<24x512xf32>
    tpu.vector_store %arg5[%c0_5, %c0_6], %4 {strides = array<i32>} : memref<24x512xf32, #tpu.memory_space<vmem>>, vector<24x512xf32>,
    return
  }
  func.func @transform_0(%arg0: i32, %arg1: i32) -> (i32, i32) {
    %c0_i32 = arith.constant 0 : i32
    return %arg0, %arg1 : i32, i32
  }
  func.func @transform_1(%arg0: i32, %arg1: i32) -> (i32, i32) {
    %c0_i32 = arith.constant 0 : i32
    return %arg0, %arg1 : i32, i32
  }
  func.func @transform_2(%arg0: i32, %arg1: i32) -> (i32, i32) {
    %c0_i32 = arith.constant 0 : i32
    return %arg0, %arg1 : i32, i32
  }
  func.func @transform_3(%arg0: i32, %arg1: i32) -> (i32, i32) {
    %c0_i32 = arith.constant 0 : i32
    return %arg0, %arg1 : i32, i32
  }
}

</mosaic_0001>

<llo_original>
// kernel: tpu_custom_call.1
$region0: #{tpu_custom_call.1}
  #allocation0 [shape = 'u32[]', space=smem, size = 0x4, offset = 0x4, fixed_abs, tag = 'smem constant byte address 0x4 - core index']
  #allocation1 [shape = 'u32[144,128]{1,0:T(1,128)}', space=vmem, size = 0x12000, scoped, tag = 'internal scratch']
  %s0 = inlined_call_operand.hbm [shape: f32[48,512], index: 0, kind: input, shape index: {}]
  %s1 = inlined_call_operand.hbm [shape: f32[48,512], index: 1, kind: input, shape index: {}]
  %s2 = inlined_call_operand.hbm [shape: f32[48,512], index: 2, kind: input, shape index: {}]
  %s3 = inlined_call_operand.hbm [shape: f32[48,512], index: 3, kind: output, shape index: {}]
  %s4 = sld [smem:[#allocation0]]
  $region57: #{tpu_custom_call.1} parent=0
    _
  %s6 = ssub.s32 1, %s4
  %s7 = scalar_select 0, %s6, %s4
  $region1: #{tpu_custom_call.1} parent=0
    #allocation2 [shape = 'u8[98304]{0}', space=vmem, size = 0x18000, scoped, tag = 'input window, operand 0']
    #allocation3 [shape = 's32[2]{0}', space=sflag, size = 0x8, scoped, tag = 'scoped memory for tpu_custom_call.1']
    #allocation4 [shape = 's32[2]{0}', space=sflag, size = 0x8, scoped, tag = 'scoped memory for tpu_custom_call.1']
    #allocation5 [shape = 'u8[98304]{0}', space=vmem, size = 0x18000, scoped, tag = 'input window, operand 1']
    #allocation6 [shape = 's32[2]{0}', space=sflag, size = 0x8, scoped, tag = 'scoped memory for tpu_custom_call.1']
    #allocation7 [shape = 'u8[98304]{0}', space=vmem, size = 0x18000, scoped, tag = 'input window, operand 2']
    #allocation8 [shape = 'u8[98304]{0}', space=vmem, size = 0x18000, scoped, tag = 'output window, operand 0']
    %8 = vsyncpa [#allocation3], 0
    %s9 = scalar_lea.sflag [#allocation3], 1
    %10 = vsyncpa %s9, 0
    %11 = vsyncpa [#allocation6], 0
    %s12 = scalar_lea.sflag [#allocation6], 1
    %13 = vsyncpa %s12, 0
    %14 = vsyncpa [#allocation4], 0
    %s15 = scalar_lea.sflag [#allocation4], 1
    %16 = vsyncpa %s15, 0
    loop: start=0, step=1, limit=4
    $region2: #{tpu_custom_call.1} parent=1 // loop_pre_header
      _
    $region3: #{tpu_custom_call.1} parent=1 // loop_header
      %s18 = sphi 0, %s22
      %p19 = scmp.ge.s32.totalorder %s18, 4
      %s25 = sphi 0, %s37
      %s26 = sphi 0, %s33
      %s27 = sphi 0, %s25
      %s28 = sphi 0, %s26
      %s29 = sphi 0, %s27
      %s30 = sphi 0, %s28
      %s42 = sphi 0, %s44
      %s45 = sphi 0, %s42
      %s46 = sphi 0, %s45
      %s62 = sphi 0, %s46
      %s70 = sphi 0, %s72
      %s73 = sphi 0, %s70
      %s74 = sphi 0, %s73
      %s90 = sphi 0, %s74
      %s98 = sphi 0, %s100
      %s101 = sphi 0, %s98
      %s102 = sphi 0, %s101
      %s118 = sphi 0, %s102
      %s126 = sphi 0, %s128
      %s129 = sphi 0, %s126
      %s130 = sphi 0, %s129
      %s146 = sphi 0, %s130
    $region4: #{tpu_custom_call.1} parent=1 // loop_header_branch
      %21 = sbr.rel (%p19) target = $region8
    $region5: #{tpu_custom_call.1} parent=1 // loop_body
      %s23 = ssub.s32 %s18, 1
      %s24 = ssub.s32 %s18, 2
      %s31 = sadd.s32 1, %s26
      %p32 = scmp.ge.s32.totalorder %s31, 1
      %s33 = scalar_select %p32, 0, %s31
      %s34 = sadd.s32 1, %s25
      %s35 = scalar_select %p32, %s34, %s25
      %p36 = scmp.ge.s32.totalorder %s35, 2
      %s37 = scalar_select %p36, 0, %s35
      %s38 = ssub.s32 %s25, %s37
      %s39 = ssub.s32 %s26, %s33
      %s40 = sor.u32 %s38, %s39
      %p41 = scmp.eq.s32.totalorder %s40, 0
      %s43 = sadd.s32 %s42, 1
      %s44 = scalar_select %p41, %s42, %s43
      %p47 = pneg %p41
      %p48 = scmp.eq.s32.totalorder %s18, 1
      %p49 = por %p47, %p48
      %p50 = scmp.ne.s32.totalorder %s42, %s45
      %p51 = scmp.eq.s32.totalorder %s18, 0
      %p52 = por %p50, %p51
      %p53 = scmp.ne.s32.totalorder %s42, %s45
      %p54 = scmp.eq.s32.totalorder %s23, 1
      %p55 = por %p53, %p54
      %p56 = scmp.ne.s32.totalorder %s45, %s46
      %p57 = scmp.eq.s32.totalorder %s23, 0
      %p58 = por %p56, %p57
      %p59 = scmp.ne.s32.totalorder %s45, %s46
      %p60 = scmp.eq.s32.totalorder %s24, 1
      %p61 = por %p59, %p60
      %p63 = scmp.ne.s32.totalorder %s46, %s62
      %p64 = scmp.eq.s32.totalorder %s24, 0
      %p65 = por %p63, %p64
      %s66 = ssub.s32 %s25, %s37
      %s67 = ssub.s32 %s26, %s33
      %s68 = sor.u32 %s66, %s67
      %p69 = scmp.eq.s32.totalorder %s68, 0
      %s71 = sadd.s32 %s70, 1
      %s72 = scalar_select %p69, %s70, %s71
      %p75 = pneg %p69
      %p76 = scmp.eq.s32.totalorder %s18, 1
      %p77 = por %p75, %p76
      %p78 = scmp.ne.s32.totalorder %s70, %s73
      %p79 = scmp.eq.s32.totalorder %s18, 0
      %p80 = por %p78, %p79
      %p81 = scmp.ne.s32.totalorder %s70, %s73
      %p82 = scmp.eq.s32.totalorder %s23, 1
      %p83 = por %p81, %p82
      %p84 = scmp.ne.s32.totalorder %s73, %s74
      %p85 = scmp.eq.s32.totalorder %s23, 0
      %p86 = por %p84, %p85
      %p87 = scmp.ne.s32.totalorder %s73, %s74
      %p88 = scmp.eq.s32.totalorder %s24, 1
      %p89 = por %p87, %p88
      %p91 = scmp.ne.s32.totalorder %s74, %s90
      %p92 = scmp.eq.s32.totalorder %s24, 0
      %p93 = por %p91, %p92
      %s94 = ssub.s32 %s25, %s37
      %s95 = ssub.s32 %s26, %s33
      %s96 = sor.u32 %s94, %s95
      %p97 = scmp.eq.s32.totalorder %s96, 0
      %s99 = sadd.s32 %s98, 1
      %s100 = scalar_select %p97, %s98, %s99
      %p103 = pneg %p97
      %p104 = scmp.eq.s32.totalorder %s18, 1
      %p105 = por %p103, %p104
      %p106 = scmp.ne.s32.totalorder %s98, %s101
      %p107 = scmp.eq.s32.totalorder %s18, 0
      %p108 = por %p106, %p107
      %p109 = scmp.ne.s32.totalorder %s98, %s101
      %p110 = scmp.eq.s32.totalorder %s23, 1
      %p111 = por %p109, %p110
      %p112 = scmp.ne.s32.totalorder %s101, %s102
      %p113 = scmp.eq.s32.totalorder %s23, 0
      %p114 = por %p112, %p113
      %p115 = scmp.ne.s32.totalorder %s101, %s102
      %p116 = scmp.eq.s32.totalorder %s24, 1
      %p117 = por %p115, %p116
      %p119 = scmp.ne.s32.totalorder %s102, %s118
      %p120 = scmp.eq.s32.totalorder %s24, 0
      %p121 = por %p119, %p120
      %s122 = ssub.s32 %s25, %s37
      %s123 = ssub.s32 %s26, %s33
      %s124 = sor.u32 %s122, %s123
      %p125 = scmp.eq.s32.totalorder %s124, 0
      %s127 = sadd.s32 %s126, 1
      %s128 = scalar_select %p125, %s126, %s127
      %p131 = pneg %p125
      %p132 = scmp.eq.s32.totalorder %s18, 1
      %p133 = por %p131, %p132
      %p134 = scmp.ne.s32.totalorder %s126, %s129
      %p135 = scmp.eq.s32.totalorder %s18, 0
      %p136 = por %p134, %p135
      %p137 = scmp.ne.s32.totalorder %s126, %s129
      %p138 = scmp.eq.s32.totalorder %s23, 1
      %p139 = por %p137, %p138
      %p140 = scmp.ne.s32.totalorder %s129, %s130
      %p141 = scmp.eq.s32.totalorder %s23, 0
      %p142 = por %p140, %p141
      %p143 = scmp.ne.s32.totalorder %s129, %s130
      %p144 = scmp.eq.s32.totalorder %s24, 1
      %p145 = por %p143, %p144
      %p147 = scmp.ne.s32.totalorder %s130, %s146
      %p148 = scmp.eq.s32.totalorder %s24, 0
      %p149 = por %p147, %p148
      %p150 = scmp.le.s32.totalorder 1, %s18
      %p151 = scmp.lt.s32.totalorder %s18, 3
      %p152 = pnand %p150, %p151
      %p153 = pneg %p152
      // Predicated region
      $region9: #{tpu_custom_call.1} parent=5 // pred_check
        _
      $region10: #{tpu_custom_call.1} parent=5 // pred_check_branch
        %155 = sbr.rel (%p152) target = $region12
      $region11: #{tpu_custom_call.1} parent=5 // pred_region
        %s156 = ssub.s32 %s18, 1
      $region12: #{tpu_custom_call.1} parent=5 // pred_fallthru
        _
      %p157 = scmp.lt.s32.totalorder %s18, 2
      // Predicated region
      $region13: #{tpu_custom_call.1} parent=5 // pred_check
        %p158 = pneg %p157
      $region14: #{tpu_custom_call.1} parent=5 // pred_check_branch
        %160 = sbr.rel (%p158) target = $region16
      $region15: #{tpu_custom_call.1} parent=5 // pred_region
        // Predicated region
        $region17: #{tpu_custom_call.1} parent=15 // pred_check
          %p161 = pneg %p52
        $region18: #{tpu_custom_call.1} parent=15 // pred_check_branch
          %163 = sbr.rel (%p161) target = $region20
        $region19: #{tpu_custom_call.1} parent=15 // pred_region
          %s164 = sand.u32 %s42, 1
          %s165 = scalar_lea.sflag [#allocation3], %s164
          %s166 = sand.u32 %s42, 1
          %s167 = smul.addr %s166, 96
          %s168 = scalar_lea.vmem [#allocation2], %s167
          %s169 = smul.u32 3, %s25
          %s170 = smul.u32 4, %s26
          %s172 = ssub.s32 1536, 1536
          %173 = vsyncadd %s165, %s172
          %s174 = smul.addr %s169, 4
          %s175 = sadd.s32 %s170, %s174
          %s176 = smul.addr %s175, 128
          %s177 = scalar_lea.hbm %s0, %s176
          %s178 = sshll.u32 %s168, 4
          %s179 = int_to_ptr.vmem [resolvable:$true] %s178
          %184 = dma.hbm_to_vmem [thread:$0]  %s177, 1536, %s179, %s165, 512, 512, 32
        $region20: #{tpu_custom_call.1} parent=15 // pred_fallthru
          _
        // Predicated region
        $region21: #{tpu_custom_call.1} parent=15 // pred_check
          %p185 = pneg %p80
        $region22: #{tpu_custom_call.1} parent=15 // pred_check_branch
          %187 = sbr.rel (%p185) target = $region24
        $region23: #{tpu_custom_call.1} parent=15 // pred_region
          %s188 = sand.u32 %s18, 1
          %s189 = scalar_lea.sflag [#allocation6], %s188
          %s190 = sand.u32 %s70, 1
          %s191 = smul.addr %s190, 96
          %s192 = scalar_lea.vmem [#allocation5], %s191
          %s193 = smul.u32 3, %s25
          %s194 = smul.u32 4, %s26
          %s196 = ssub.s32 1536, 1536
          %197 = vsyncadd %s189, %s196
          %s198 = smul.addr %s193, 4
          %s199 = sadd.s32 %s194, %s198
          %s200 = smul.addr %s199, 128
          %s201 = scalar_lea.hbm %s1, %s200
          %s202 = sshll.u32 %s192, 4
          %s203 = int_to_ptr.vmem [resolvable:$true] %s202
          %208 = dma.hbm_to_vmem [thread:$0]  %s201, 1536, %s203, %s189, 512, 512, 32
        $region24: #{tpu_custom_call.1} parent=15 // pred_fallthru
          _
        // Predicated region
        $region25: #{tpu_custom_call.1} parent=15 // pred_check
          %p209 = pneg %p108
        $region26: #{tpu_custom_call.1} parent=15 // pred_check_branch
          %211 = sbr.rel (%p209) target = $region28
        $region27: #{tpu_custom_call.1} parent=15 // pred_region
          %s212 = sand.u32 %s18, 1
          %s213 = scalar_lea.sflag [#allocation6], %s212
          %s214 = sand.u32 %s98, 1
          %s215 = smul.addr %s214, 96
          %s216 = scalar_lea.vmem [#allocation7], %s215
          %s217 = smul.u32 3, %s25
          %s218 = smul.u32 4, %s26
          %s220 = ssub.s32 1536, 1536
          %221 = vsyncadd %s213, %s220
          %s222 = smul.addr %s217, 4
          %s223 = sadd.s32 %s218, %s222
          %s224 = smul.addr %s223, 128
          %s225 = scalar_lea.hbm %s2, %s224
          %s226 = sshll.u32 %s216, 4
          %s227 = int_to_ptr.vmem [resolvable:$true] %s226
          %232 = dma.hbm_to_vmem [thread:$0]  %s225, 1536, %s227, %s213, 512, 512, 32
        $region28: #{tpu_custom_call.1} parent=15 // pred_fallthru
          _
      $region16: #{tpu_custom_call.1} parent=5 // pred_fallthru
        _
      %p233 = scmp.le.s32.totalorder 1, %s18
      %p234 = scmp.lt.s32.totalorder %s18, 3
      %p235 = pnand %p233, %p234
      %p236 = pneg %p235
      // Predicated region
      $region29: #{tpu_custom_call.1} parent=5 // pred_check
        _
      $region30: #{tpu_custom_call.1} parent=5 // pred_check_branch
        %238 = sbr.rel (%p235) target = $region32
      $region31: #{tpu_custom_call.1} parent=5 // pred_region
        %s239 = ssub.s32 %s18, 1
        %s240 = sand.u32 %s45, 1
        %s241 = scalar_lea.sflag [#allocation3], %s240
        %s242 = sand.u32 %s45, 1
        %s243 = smul.addr %s242, 96
        %s244 = scalar_lea.vmem [#allocation2], %s243
        // Predicated region
        $region33: #{tpu_custom_call.1} parent=31 // pred_check
          %p245 = pneg %p58
        $region34: #{tpu_custom_call.1} parent=31 // pred_check_branch
          %247 = sbr.rel (%p245) target = $region36
        $region35: #{tpu_custom_call.1} parent=31 // pred_region
          %248 = dma.done %s241, 1536
        $region36: #{tpu_custom_call.1} parent=31 // pred_fallthru
          _
        %s249 = sand.u32 %s23, 1
        %s250 = scalar_lea.sflag [#allocation6], %s249
        %s251 = sand.u32 %s73, 1
        %s252 = smul.addr %s251, 96
        %s253 = scalar_lea.vmem [#allocation5], %s252
        // Predicated region
        $region37: #{tpu_custom_call.1} parent=31 // pred_check
          %p254 = pneg %p86
        $region38: #{tpu_custom_call.1} parent=31 // pred_check_branch
          %256 = sbr.rel (%p254) target = $region40
        $region39: #{tpu_custom_call.1} parent=31 // pred_region
          %257 = dma.done %s250, 1536
        $region40: #{tpu_custom_call.1} parent=31 // pred_fallthru
          _
        %s258 = sand.u32 %s23, 1
        %s259 = scalar_lea.sflag [#allocation6], %s258
        %s260 = sand.u32 %s101, 1
        %s261 = smul.addr %s260, 96
        %s262 = scalar_lea.vmem [#allocation7], %s261
        // Predicated region
        $region41: #{tpu_custom_call.1} parent=31 // pred_check
          %p263 = pneg %p114
        $region42: #{tpu_custom_call.1} parent=31 // pred_check_branch
          %265 = sbr.rel (%p263) target = $region44
        $region43: #{tpu_custom_call.1} parent=31 // pred_region
          %266 = dma.done %s259, 1536
        $region44: #{tpu_custom_call.1} parent=31 // pred_fallthru
          _
        %s267 = sand.u32 %s45, 1
        %s268 = scalar_lea.sflag [#allocation3], %s267
        %s269 = sand.u32 %s45, 1
        %s270 = smul.addr %s269, 96
        %s271 = scalar_lea.vmem [#allocation2], %s270
        %p272 = pneg %p58
        %p273 = pneg %p55
        %s274 = sand.u32 %s23, 1
        %s275 = scalar_lea.sflag [#allocation6], %s274
        %s276 = sand.u32 %s73, 1
        %s277 = smul.addr %s276, 96
        %s278 = scalar_lea.vmem [#allocation5], %s277
        %p279 = pneg %p86
        %p280 = pneg %p83
        %s281 = sand.u32 %s23, 1
        %s282 = scalar_lea.sflag [#allocation6], %s281
        %s283 = sand.u32 %s101, 1
        %s284 = smul.addr %s283, 96
        %s285 = scalar_lea.vmem [#allocation7], %s284
        %p286 = pneg %p114
        %p287 = pneg %p111
        %p288 = pneg %p142
        %p289 = pneg %p139
        %s290 = sand.u32 %s129, 1
        %s291 = scalar_lea.sflag [#allocation4], %s290
        %s292 = sand.u32 %s129, 1
        %s293 = smul.addr %s292, 96
        %s294 = scalar_lea.vmem [#allocation8], %s293
        %s295 = smul.u32 3, %s27
        %s296 = smul.u32 4, %s28
        %s297 = smul.u32 3, %s27
        %s298 = smul.u32 4, %s28
        %s299 = smul.u32 3, %s27
        %s300 = smul.u32 4, %s28
        %s301 = smul.u32 3, %s27
        %s302 = smul.u32 4, %s28
        %v303 = vld [vmem:[%s244] sm:$0xff]
        %v304 = vld [vmem:[%s244 + $0x8] sm:$0xff]
        %v305 = vld [vmem:[%s244 + $0x10] sm:$0xff]
        %v306 = vld [vmem:[%s244 + $0x18] sm:$0xff]
        %v307 = vld [vmem:[%s244 + $0x20] sm:$0xff]
        %v308 = vld [vmem:[%s244 + $0x28] sm:$0xff]
        %v309 = vld [vmem:[%s244 + $0x30] sm:$0xff]
        %v310 = vld [vmem:[%s244 + $0x38] sm:$0xff]
        %v311 = vld [vmem:[%s244 + $0x40] sm:$0xff]
        %v312 = vld [vmem:[%s244 + $0x48] sm:$0xff]
        %v313 = vld [vmem:[%s244 + $0x50] sm:$0xff]
        %v314 = vld [vmem:[%s244 + $0x58] sm:$0xff]
        %v315 = vld [vmem:[%s253] sm:$0xff]
        %v316 = vld [vmem:[%s253 + $0x8] sm:$0xff]
        %v317 = vld [vmem:[%s253 + $0x10] sm:$0xff]
        %v318 = vld [vmem:[%s253 + $0x18] sm:$0xff]
        %v319 = vld [vmem:[%s253 + $0x20] sm:$0xff]
        %v320 = vld [vmem:[%s253 + $0x28] sm:$0xff]
        %v321 = vld [vmem:[%s253 + $0x30] sm:$0xff]
        %v322 = vld [vmem:[%s253 + $0x38] sm:$0xff]
        %v323 = vld [vmem:[%s253 + $0x40] sm:$0xff]
        %v324 = vld [vmem:[%s253 + $0x48] sm:$0xff]
        %v325 = vld [vmem:[%s253 + $0x50] sm:$0xff]
        %v326 = vld [vmem:[%s253 + $0x58] sm:$0xff]
        %v327 = vmax.f32 %v303, %v315
        %v328 = vmax.f32 %v304, %v316
        %v329 = vmax.f32 %v305, %v317
        %v330 = vmax.f32 %v306, %v318
        %v331 = vmax.f32 %v307, %v319
        %v332 = vmax.f32 %v308, %v320
        %v333 = vmax.f32 %v309, %v321
        %v334 = vmax.f32 %v310, %v322
        %v335 = vmax.f32 %v311, %v323
        %v336 = vmax.f32 %v312, %v324
        %v337 = vmax.f32 %v313, %v325
        %v338 = vmax.f32 %v314, %v326
        %v339 = vld [vmem:[%s262] sm:$0xff]
        %v340 = vld [vmem:[%s262 + $0x8] sm:$0xff]
        %v341 = vld [vmem:[%s262 + $0x10] sm:$0xff]
        %v342 = vld [vmem:[%s262 + $0x18] sm:$0xff]
        %v343 = vld [vmem:[%s262 + $0x20] sm:$0xff]
        %v344 = vld [vmem:[%s262 + $0x28] sm:$0xff]
        %v345 = vld [vmem:[%s262 + $0x30] sm:$0xff]
        %v346 = vld [vmem:[%s262 + $0x38] sm:$0xff]
        %v347 = vld [vmem:[%s262 + $0x40] sm:$0xff]
        %v348 = vld [vmem:[%s262 + $0x48] sm:$0xff]
        %v349 = vld [vmem:[%s262 + $0x50] sm:$0xff]
        %v350 = vld [vmem:[%s262 + $0x58] sm:$0xff]
        %v351 = vmax.f32 %v327, %v339
        %v352 = vmax.f32 %v328, %v340
        %v353 = vmax.f32 %v329, %v341
        %v354 = vmax.f32 %v330, %v342
        %v355 = vmax.f32 %v331, %v343
        %v356 = vmax.f32 %v332, %v344
        %v357 = vmax.f32 %v333, %v345
        %v358 = vmax.f32 %v334, %v346
        %v359 = vmax.f32 %v335, %v347
        %v360 = vmax.f32 %v336, %v348
        %v361 = vmax.f32 %v337, %v349
        %v362 = vmax.f32 %v338, %v350
        %363 = vst [vmem:[%s294] sm:$0xff] %v351
        %364 = vst [vmem:[%s294 + $0x8] sm:$0xff] %v352
        %365 = vst [vmem:[%s294 + $0x10] sm:$0xff] %v353
        %366 = vst [vmem:[%s294 + $0x18] sm:$0xff] %v354
        %367 = vst [vmem:[%s294 + $0x20] sm:$0xff] %v355
        %368 = vst [vmem:[%s294 + $0x28] sm:$0xff] %v356
        %369 = vst [vmem:[%s294 + $0x30] sm:$0xff] %v357
        %370 = vst [vmem:[%s294 + $0x38] sm:$0xff] %v358
        %371 = vst [vmem:[%s294 + $0x40] sm:$0xff] %v359
        %372 = vst [vmem:[%s294 + $0x48] sm:$0xff] %v360
        %373 = vst [vmem:[%s294 + $0x50] sm:$0xff] %v361
        %374 = vst [vmem:[%s294 + $0x58] sm:$0xff] %v362
        %s375 = sand.u32 %s129, 1
        %s376 = scalar_lea.sflag [#allocation4], %s375
        %s377 = sand.u32 %s129, 1
        %s378 = smul.addr %s377, 96
        %s379 = scalar_lea.vmem [#allocation8], %s378
        // Predicated region
        $region45: #{tpu_custom_call.1} parent=31 // pred_check
          %p380 = pneg %p139
        $region46: #{tpu_custom_call.1} parent=31 // pred_check_branch
          %382 = sbr.rel (%p380) target = $region48
        $region47: #{tpu_custom_call.1} parent=31 // pred_region
          %s383 = smul.u32 3, %s27
          %s384 = smul.u32 4, %s28
          %s386 = ssub.s32 1536, 1536
          %387 = vsyncadd %s376, %s386
          %s388 = smul.addr %s383, 4
          %s389 = sadd.s32 %s384, %s388
          %s390 = smul.addr %s389, 128
          %s391 = scalar_lea.hbm %s3, %s390
          %s392 = sshll.u32 %s379, 4
          %s393 = int_to_ptr.vmem [resolvable:$true] %s392
          %398 = dma.vmem_to_hbm [thread:$0]  %s393, 1536, %s391, %s376, 512, 512, 32
        $region48: #{tpu_custom_call.1} parent=31 // pred_fallthru
          _
      $region32: #{tpu_custom_call.1} parent=5 // pred_fallthru
        _
      %p399 = scmp.le.s32.totalorder 2, %s18
      // Predicated region
      $region49: #{tpu_custom_call.1} parent=5 // pred_check
        %p400 = pneg %p399
      $region50: #{tpu_custom_call.1} parent=5 // pred_check_branch
        %402 = sbr.rel (%p400) target = $region52
      $region51: #{tpu_custom_call.1} parent=5 // pred_region
        %s403 = ssub.s32 %s18, 2
        // Predicated region
        $region53: #{tpu_custom_call.1} parent=51 // pred_check
          %p404 = pneg %p145
        $region54: #{tpu_custom_call.1} parent=51 // pred_check_branch
          %406 = sbr.rel (%p404) target = $region56
        $region55: #{tpu_custom_call.1} parent=51 // pred_region
          %s407 = sand.u32 %s130, 1
          %s408 = scalar_lea.sflag [#allocation4], %s407
          %s409 = sand.u32 %s130, 1
          %s410 = smul.addr %s409, 96
          %s411 = scalar_lea.vmem [#allocation8], %s410
          %412 = dma.done %s408, 1536
        $region56: #{tpu_custom_call.1} parent=51 // pred_fallthru
          _
      $region52: #{tpu_custom_call.1} parent=5 // pred_fallthru
        _
    $region6: #{tpu_custom_call.1} parent=1 // loop_footer
      %s22 = sadd.s32 1, %s18
    $region7: #{tpu_custom_call.1} parent=1 // loop_footer_branch
      %17 = sbr.rel target = $region3
    $region8: #{tpu_custom_call.1} parent=1 // loop_exit
      _
    %413 = vsyncpa [#allocation3], 1
    %s414 = scalar_lea.sflag [#allocation3], 1
    %415 = vsyncpa %s414, 1
    %416 = vsyncpa [#allocation6], 1
    %s417 = scalar_lea.sflag [#allocation6], 1
    %418 = vsyncpa %s417, 1
    %419 = vsyncpa [#allocation4], 1
    %s420 = scalar_lea.sflag [#allocation4], 1
    %421 = vsyncpa %s420, 1

</llo_original>
